<compile_context>
chip_gen: v7x
topology: tpu7x:2x2x1
jax: 0.10.0
libtpu: 0.0.40
codegen_flags: <defaults>
</compile_context>

<pallas_src>
import math
import functools

import jax
import jax.numpy as jnp
from jax import lax
from jax.experimental import pallas as pl
from jax.experimental.pallas import tpu as pltpu


def mhsa_kernel(x_q_ref, x_kv_ref, wq_ref, wkv_ref, wo_ref, o_ref, attn_scratch,
                *, num_heads):
    E = wq_ref.shape[0]
    D = E // num_heads

    # bf16 operands for the MXU; f32 accumulation everywhere.
    xq = x_q_ref[0].astype(jnp.bfloat16)       # [TQ, E]  query rows
    xkv = x_kv_ref[0].astype(jnp.bfloat16)     # [S,  E]  full sequence (for K/V)

    # Q projection (1/sqrt(D) already folded into wq) and fused K/V projection.
    q = jnp.dot(xq, wq_ref[...], preferred_element_type=jnp.float32)      # [TQ, E]
    kv = jnp.dot(xkv, wkv_ref[...], preferred_element_type=jnp.float32)   # [S, 2E]

    q = q.astype(jnp.bfloat16)
    k = kv[:, :E].astype(jnp.bfloat16)
    v = kv[:, E:].astype(jnp.bfloat16)

    # Per-head attention; head outputs land directly in the scratch slab.
    for h in range(num_heads):
        sl = slice(h * D, (h + 1) * D)
        qh = q[:, sl]                                                    # [TQ, D]
        kh = k[:, sl]                                                    # [S,  D]
        vh = v[:, sl]                                                    # [S,  D]

        # scores = qh @ kh^T (contraction over D), f32 accumulation.
        scores = lax.dot_general(qh, kh, (((1,), (1,)), ((), ())),
                                 preferred_element_type=jnp.float32)     # [TQ, S]

        # Numerically-stable softmax stats in f32; normalization deferred.
        m = jnp.max(scores, axis=-1, keepdims=True)
        p = jnp.exp(scores - m)
        denom = jnp.sum(p, axis=-1, keepdims=True)                       # [TQ, 1]

        o_un = jnp.dot(p.astype(jnp.bfloat16), vh,
                       preferred_element_type=jnp.float32)               # [TQ, D]
        attn_scratch[:, sl] = o_un * pl.reciprocal(denom, approx=True)

    # Output projection.
    out = jnp.dot(attn_scratch[...].astype(jnp.bfloat16), wo_ref[...],
                  preferred_element_type=jnp.float32)                    # [TQ, E]
    o_ref[0] = out.astype(o_ref.dtype)


def _pick_q_tile(S):
    for t in (512, 256, 128):
        if S % t == 0:
            return t
    return S  # full sequence as a single (lane/sublane-legal) tile


def mhsa_pallas(x, wq, wk, wv, wo, num_heads):
    """x: [B, S, E]; wq/wk/wv/wo: [E, E] in PyTorch nn.Linear [out, in] layout."""
    B, S, E = x.shape
    assert E % num_heads == 0
    D = E // num_heads
    scale = 1.0 / math.sqrt(D)

    # Wrapper-side layout plumbing: pre-transpose to [in, out], fold the scale
    # into Wq, fuse K/V weights, and cast weights to bf16.
    wq_t = (wq.T * scale).astype(jnp.bfloat16)                           # [E, E]
    wkv_t = jnp.concatenate([wk.T, wv.T], axis=1).astype(jnp.bfloat16)   # [E, 2E]
    wo_t = wo.T.astype(jnp.bfloat16)                                     # [E, E]

    TQ = _pick_q_tile(S)
    q_tiles = S // TQ

    flops = 8 * B * S * E * E + 4 * B * num_heads * S * S * D
    transcendentals = B * num_heads * S * S
    bytes_accessed = (2 * 4 * B * S * E          # x in, out (f32)
                      + 2 * 4 * E * E)           # bf16 weights (Wq + Wkv + Wo = 4E^2)

    kernel = functools.partial(mhsa_kernel, num_heads=num_heads)
    return pl.pallas_call(
        kernel,
        out_shape=jax.ShapeDtypeStruct((B, S, E), x.dtype),
        grid_spec=pltpu.PrefetchScalarGridSpec(
            num_scalar_prefetch=0,
            grid=(B, q_tiles),
            in_specs=[
                pl.BlockSpec((1, TQ, E), lambda b, qi: (b, qi, 0)),   # x (query tile)
                pl.BlockSpec((1, S, E), lambda b, qi: (b, 0, 0)),     # x (full seq for K/V)
                pl.BlockSpec((E, E), lambda b, qi: (0, 0)),           # Wq (scaled, [in,out])
                pl.BlockSpec((E, 2 * E), lambda b, qi: (0, 0)),       # Wkv fused
                pl.BlockSpec((E, E), lambda b, qi: (0, 0)),           # Wo
            ],
            out_specs=pl.BlockSpec((1, TQ, E), lambda b, qi: (b, qi, 0)),
            scratch_shapes=[pltpu.VMEM((TQ, E), jnp.float32)],
        ),
        compiler_params=pltpu.CompilerParams(
            dimension_semantics=("parallel", "parallel"),
            vmem_limit_bytes=32 * 1024 * 1024,
        ),
        cost_estimate=pl.CostEstimate(
            flops=flops,
            transcendentals=transcendentals,
            bytes_accessed=bytes_accessed,
        ),
    )(x, x, wq_t, wkv_t, wo_t)


def mhsa_reference(x, wq, wk, wv, wo, num_heads):
    B, S, E = x.shape
    D = E // num_heads
    q = (x @ wq.T).reshape(B, S, num_heads, D).transpose(0, 2, 1, 3)
    k = (x @ wk.T).reshape(B, S, num_heads, D).transpose(0, 2, 1, 3)
    v = (x @ wv.T).reshape(B, S, num_heads, D).transpose(0, 2, 1, 3)
    scores = jnp.einsum("bhqd,bhkd->bhqk", q, k) / math.sqrt(D)
    w = jax.nn.softmax(scores, axis=-1)
    out = jnp.einsum("bhqk,bhkd->bhqd", w, v)
    out = out.transpose(0, 2, 1, 3).reshape(B, S, E)
    return out @ wo.T


if __name__ == "__main__":
    B, S, E, H = 2, 8, 32, 4

    key = jax.random.PRNGKey(0)
    kx, kq, kk, kv, ko = jax.random.split(key, 5)

    x = jax.random.normal(kx, (B, S, E), dtype=jnp.float32)
    # Deterministic weight init (uniform, roughly like PyTorch Linear init scale)
    bound = 1.0 / math.sqrt(E)
    wq = jax.random.uniform(kq, (E, E), jnp.float32, -bound, bound)
    wk = jax.random.uniform(kk, (E, E), jnp.float32, -bound, bound)
    wv = jax.random.uniform(kv, (E, E), jnp.float32, -bound, bound)
    wo = jax.random.uniform(ko, (E, E), jnp.float32, -bound, bound)

    out = mhsa_pallas(x, wq, wk, wv, wo, H)
    out = jax.block_until_ready(out)

    ref = mhsa_reference(x, wq, wk, wv, wo, H)
    # bf16 MXU operands (with f32 accumulation) -> loosened tolerance vs f32 ref.
    assert jnp.allclose(out, ref, atol=2e-2, rtol=2e-2), \
        f"max abs diff {jnp.max(jnp.abs(out - ref))}"

    print("KERNEL_OK")
</pallas_src>

<mosaic_0001>
module attributes {stable_mosaic.version = 11 : i64} {
  func.func @mhsa_kernel(%arg0: i32, %arg1: i32, %arg2: memref<1x8x32xf32, #tpu.memory_space<vmem>>, %arg3: memref<1x8x32xf32, #tpu.memory_space<vmem>>, %arg4: memref<32x32xbf16, #tpu.memory_space<vmem>>, %arg5: memref<32x64xbf16, #tpu.memory_space<vmem>>, %arg6: memref<32x32xbf16, #tpu.memory_space<vmem>>, %arg7: memref<1x8x32xf32, #tpu.memory_space<vmem>>, %arg8: memref<8x32xf32, #tpu.memory_space<vmem>>) attributes {dimension_semantics = [#tpu.dimension_semantics<parallel>, #tpu.dimension_semantics<parallel>], iteration_bounds = array<i64: 2, 1>, scalar_prefetch = 0 : i64, scratch_operands = 1 : i64, tpu.core_type = #tpu.core_type<tc>, window_params = [{transform_indices = @transform_0, window_bounds = array<i64: 1, 8, 32>}, {transform_indices = @transform_1, window_bounds = array<i64: 1, 8, 32>}, {pipeline_mode = #tpu.pipeline_mode<synchronous>, transform_indices = @transform_2, window_bounds = array<i64: 32, 32>}, {pipeline_mode = #tpu.pipeline_mode<synchronous>, transform_indices = @transform_3, window_bounds = array<i64: 32, 64>}, {pipeline_mode = #tpu.pipeline_mode<synchronous>, transform_indices = @transform_4, window_bounds = array<i64: 32, 32>}, {transform_indices = @transform_5, window_bounds = array<i64: 1, 8, 32>}]} {
    %c0 = arith.constant 0 : index
    %c0_0 = arith.constant 0 : index
    %c0_1 = arith.constant 0 : index
    %0 = vector.load %arg2[%c0, %c0_0, %c0_1] : memref<1x8x32xf32, #tpu.memory_space<vmem>>, vector<1x8x32xf32>
    %1 = vector.shape_cast %0 : vector<1x8x32xf32> to vector<8x32xf32>
    %2 = arith.truncf %1 : vector<8x32xf32> to vector<8x32xbf16>
    %c0_2 = arith.constant 0 : index
    %c0_3 = arith.constant 0 : index
    %c0_4 = arith.constant 0 : index
    %3 = vector.load %arg3[%c0_2, %c0_3, %c0_4] : memref<1x8x32xf32, #tpu.memory_space<vmem>>, vector<1x8x32xf32>
    %4 = vector.shape_cast %3 : vector<1x8x32xf32> to vector<8x32xf32>
    %5 = arith.truncf %4 : vector<8x32xf32> to vector<8x32xbf16>
    %c0_5 = arith.constant 0 : index
    %c0_6 = arith.constant 0 : index
    %6 = vector.load %arg4[%c0_5, %c0_6] : memref<32x32xbf16, #tpu.memory_space<vmem>>, vector<32x32xbf16>
    %cst = arith.constant dense<0.000000e+00> : vector<8x32xf32>
    %7 = tpu.matmul %2, %6, %cst {dimension_numbers = #tpu.dot_dimension_numbers<[1], [0], [0], [1], [0, 0, 1, 1], [], []>} : vector<8x32xbf16>, vector<32x32xbf16>, vector<8x32xf32> -> vector<8x32xf32>
    %c0_7 = arith.constant 0 : index
    %c0_8 = arith.constant 0 : index
    %8 = vector.load %arg5[%c0_7, %c0_8] : memref<32x64xbf16, #tpu.memory_space<vmem>>, vector<32x64xbf16>
    %cst_9 = arith.constant dense<0.000000e+00> : vector<8x64xf32>
    %9 = tpu.matmul %5, %8, %cst_9 {dimension_numbers = #tpu.dot_dimension_numbers<[1], [0], [0], [1], [0, 0, 1, 1], [], []>} : vector<8x32xbf16>, vector<32x64xbf16>, vector<8x64xf32> -> vector<8x64xf32>
    %10 = arith.truncf %7 : vector<8x32xf32> to vector<8x32xbf16>
    %11 = vector.extract_strided_slice %9 {offsets = [0, 0], sizes = [8, 32], strides = [1, 1]} : vector<8x64xf32> to vector<8x32xf32>
    %12 = arith.truncf %11 : vector<8x32xf32> to vector<8x32xbf16>
    %13 = vector.extract_strided_slice %9 {offsets = [0, 32], sizes = [8, 32], strides = [1, 1]} : vector<8x64xf32> to vector<8x32xf32>
    %14 = arith.truncf %13 : vector<8x32xf32> to vector<8x32xbf16>
    %15 = vector.extract_strided_slice %10 {offsets = [0, 0], sizes = [8, 8], strides = [1, 1]} : vector<8x32xbf16> to vector<8x8xbf16>
    %16 = vector.extract_strided_slice %12 {offsets = [0, 0], sizes = [8, 8], strides = [1, 1]} : vector<8x32xbf16> to vector<8x8xbf16>
    %17 = vector.extract_strided_slice %14 {offsets = [0, 0], sizes = [8, 8], strides = [1, 1]} : vector<8x32xbf16> to vector<8x8xbf16>
    %cst_10 = arith.constant dense<0.000000e+00> : vector<8x8xf32>
    %18 = tpu.matmul %15, %16, %cst_10 {dimension_numbers = #tpu.dot_dimension_numbers<[1], [1], [0], [0], [0, 0, 1, 0], [], []>} : vector<8x8xbf16>, vector<8x8xbf16>, vector<8x8xf32> -> vector<8x8xf32>
    %cst_11 = arith.constant dense<0xFF800000> : vector<8xf32>
    %19 = vector.multi_reduction <maximumf>, %18, %cst_11 [1] : vector<8x8xf32> to vector<8xf32>
    %20 = vector.shape_cast %19 : vector<8xf32> to vector<8x1xf32>
    %21 = vector.broadcast %20 : vector<8x1xf32> to vector<8x8xf32>
    %22 = arith.subf %18, %21 : vector<8x8xf32>
    %23 = math.exp %22 : vector<8x8xf32>
    %cst_12 = arith.constant dense<0.000000e+00> : vector<8xf32>
    %24 = vector.multi_reduction <add>, %23, %cst_12 [1] : vector<8x8xf32> to vector<8xf32>
    %25 = vector.shape_cast %24 : vector<8xf32> to vector<8x1xf32>
    %26 = arith.truncf %23 : vector<8x8xf32> to vector<8x8xbf16>
    %cst_13 = arith.constant dense<0.000000e+00> : vector<8x8xf32>
    %27 = tpu.matmul %26, %17, %cst_13 {dimension_numbers = #tpu.dot_dimension_numbers<[1], [0], [0], [1], [0, 0, 1, 1], [], []>} : vector<8x8xbf16>, vector<8x8xbf16>, vector<8x8xf32> -> vector<8x8xf32>
    %28 = tpu.reciprocal %25 {approx = true} : vector<8x1xf32> -> vector<8x1xf32>
    %29 = vector.broadcast %28 : vector<8x1xf32> to vector<8x8xf32>
    %30 = arith.mulf %27, %29 : vector<8x8xf32>
    %c0_14 = arith.constant 0 : index
    %c0_15 = arith.constant 0 : index
    %31 = vector.load %arg8[%c0_14, %c0_15] : memref<8x32xf32, #tpu.memory_space<vmem>>, vector<8x8xf32>
    tpu.vector_store %arg8[%c0_14, %c0_15], %30 {strides = array<i32>} : memref<8x32xf32, #tpu.memory_space<vmem>>, vector<8x8xf32>,
    %32 = vector.extract_strided_slice %10 {offsets = [0, 8], sizes = [8, 8], strides = [1, 1]} : vector<8x32xbf16> to vector<8x8xbf16>
    %33 = vector.extract_strided_slice %12 {offsets = [0, 8], sizes = [8, 8], strides = [1, 1]} : vector<8x32xbf16> to vector<8x8xbf16>
    %34 = vector.extract_strided_slice %14 {offsets = [0, 8], sizes = [8, 8], strides = [1, 1]} : vector<8x32xbf16> to vector<8x8xbf16>
    %cst_16 = arith.constant dense<0.000000e+00> : vector<8x8xf32>
    %35 = tpu.matmul %32, %33, %cst_16 {dimension_numbers = #tpu.dot_dimension_numbers<[1], [1], [0], [0], [0, 0, 1, 0], [], []>} : vector<8x8xbf16>, vector<8x8xbf16>, vector<8x8xf32> -> vector<8x8xf32>
    %cst_17 = arith.constant dense<0xFF800000> : vector<8xf32>
    %36 = vector.multi_reduction <maximumf>, %35, %cst_17 [1] : vector<8x8xf32> to vector<8xf32>
    %37 = vector.shape_cast %36 : vector<8xf32> to vector<8x1xf32>
    %38 = vector.broadcast %37 : vector<8x1xf32> to vector<8x8xf32>
    %39 = arith.subf %35, %38 : vector<8x8xf32>
    %40 = math.exp %39 : vector<8x8xf32>
    %cst_18 = arith.constant dense<0.000000e+00> : vector<8xf32>
    %41 = vector.multi_reduction <add>, %40, %cst_18 [1] : vector<8x8xf32> to vector<8xf32>
    %42 = vector.shape_cast %41 : vector<8xf32> to vector<8x1xf32>
    %43 = arith.truncf %40 : vector<8x8xf32> to vector<8x8xbf16>
    %cst_19 = arith.constant dense<0.000000e+00> : vector<8x8xf32>
    %44 = tpu.matmul %43, %34, %cst_19 {dimension_numbers = #tpu.dot_dimension_numbers<[1], [0], [0], [1], [0, 0, 1, 1], [], []>} : vector<8x8xbf16>, vector<8x8xbf16>, vector<8x8xf32> -> vector<8x8xf32>
    %45 = tpu.reciprocal %42 {approx = true} : vector<8x1xf32> -> vector<8x1xf32>
    %46 = vector.broadcast %45 : vector<8x1xf32> to vector<8x8xf32>
    %47 = arith.mulf %44, %46 : vector<8x8xf32>
    %c0_20 = arith.constant 0 : index
    %c8 = arith.constant 8 : index
    %48 = vector.load %arg8[%c0_20, %c8] : memref<8x32xf32, #tpu.memory_space<vmem>>, vector<8x8xf32>
    tpu.vector_store %arg8[%c0_20, %c8], %47 {strides = array<i32>} : memref<8x32xf32, #tpu.memory_space<vmem>>, vector<8x8xf32>,
    %49 = vector.extract_strided_slice %10 {offsets = [0, 16], sizes = [8, 8], strides = [1, 1]} : vector<8x32xbf16> to vector<8x8xbf16>
    %50 = vector.extract_strided_slice %12 {offsets = [0, 16], sizes = [8, 8], strides = [1, 1]} : vector<8x32xbf16> to vector<8x8xbf16>
    %51 = vector.extract_strided_slice %14 {offsets = [0, 16], sizes = [8, 8], strides = [1, 1]} : vector<8x32xbf16> to vector<8x8xbf16>
    %cst_21 = arith.constant dense<0.000000e+00> : vector<8x8xf32>
    %52 = tpu.matmul %49, %50, %cst_21 {dimension_numbers = #tpu.dot_dimension_numbers<[1], [1], [0], [0], [0, 0, 1, 0], [], []>} : vector<8x8xbf16>, vector<8x8xbf16>, vector<8x8xf32> -> vector<8x8xf32>
    %cst_22 = arith.constant dense<0xFF800000> : vector<8xf32>
    %53 = vector.multi_reduction <maximumf>, %52, %cst_22 [1] : vector<8x8xf32> to vector<8xf32>
    %54 = vector.shape_cast %53 : vector<8xf32> to vector<8x1xf32>
    %55 = vector.broadcast %54 : vector<8x1xf32> to vector<8x8xf32>
    %56 = arith.subf %52, %55 : vector<8x8xf32>
    %57 = math.exp %56 : vector<8x8xf32>
    %cst_23 = arith.constant dense<0.000000e+00> : vector<8xf32>
    %58 = vector.multi_reduction <add>, %57, %cst_23 [1] : vector<8x8xf32> to vector<8xf32>
    %59 = vector.shape_cast %58 : vector<8xf32> to vector<8x1xf32>
    %60 = arith.truncf %57 : vector<8x8xf32> to vector<8x8xbf16>
    %cst_24 = arith.constant dense<0.000000e+00> : vector<8x8xf32>
    %61 = tpu.matmul %60, %51, %cst_24 {dimension_numbers = #tpu.dot_dimension_numbers<[1], [0], [0], [1], [0, 0, 1, 1], [], []>} : vector<8x8xbf16>, vector<8x8xbf16>, vector<8x8xf32> -> vector<8x8xf32>
    %62 = tpu.reciprocal %59 {approx = true} : vector<8x1xf32> -> vector<8x1xf32>
    %63 = vector.broadcast %62 : vector<8x1xf32> to vector<8x8xf32>
    %64 = arith.mulf %61, %63 : vector<8x8xf32>
    %c0_25 = arith.constant 0 : index
    %c16 = arith.constant 16 : index
    %65 = vector.load %arg8[%c0_25, %c16] : memref<8x32xf32, #tpu.memory_space<vmem>>, vector<8x8xf32>
    tpu.vector_store %arg8[%c0_25, %c16], %64 {strides = array<i32>} : memref<8x32xf32, #tpu.memory_space<vmem>>, vector<8x8xf32>,
    %66 = vector.extract_strided_slice %10 {offsets = [0, 24], sizes = [8, 8], strides = [1, 1]} : vector<8x32xbf16> to vector<8x8xbf16>
    %67 = vector.extract_strided_slice %12 {offsets = [0, 24], sizes = [8, 8], strides = [1, 1]} : vector<8x32xbf16> to vector<8x8xbf16>
    %68 = vector.extract_strided_slice %14 {offsets = [0, 24], sizes = [8, 8], strides = [1, 1]} : vector<8x32xbf16> to vector<8x8xbf16>
    %cst_26 = arith.constant dense<0.000000e+00> : vector<8x8xf32>
    %69 = tpu.matmul %66, %67, %cst_26 {dimension_numbers = #tpu.dot_dimension_numbers<[1], [1], [0], [0], [0, 0, 1, 0], [], []>} : vector<8x8xbf16>, vector<8x8xbf16>, vector<8x8xf32> -> vector<8x8xf32>
    %cst_27 = arith.constant dense<0xFF800000> : vector<8xf32>
    %70 = vector.multi_reduction <maximumf>, %69, %cst_27 [1] : vector<8x8xf32> to vector<8xf32>
    %71 = vector.shape_cast %70 : vector<8xf32> to vector<8x1xf32>
    %72 = vector.broadcast %71 : vector<8x1xf32> to vector<8x8xf32>
    %73 = arith.subf %69, %72 : vector<8x8xf32>
    %74 = math.exp %73 : vector<8x8xf32>
    %cst_28 = arith.constant dense<0.000000e+00> : vector<8xf32>
    %75 = vector.multi_reduction <add>, %74, %cst_28 [1] : vector<8x8xf32> to vector<8xf32>
    %76 = vector.shape_cast %75 : vector<8xf32> to vector<8x1xf32>
    %77 = arith.truncf %74 : vector<8x8xf32> to vector<8x8xbf16>
    %cst_29 = arith.constant dense<0.000000e+00> : vector<8x8xf32>
    %78 = tpu.matmul %77, %68, %cst_29 {dimension_numbers = #tpu.dot_dimension_numbers<[1], [0], [0], [1], [0, 0, 1, 1], [], []>} : vector<8x8xbf16>, vector<8x8xbf16>, vector<8x8xf32> -> vector<8x8xf32>
    %79 = tpu.reciprocal %76 {approx = true} : vector<8x1xf32> -> vector<8x1xf32>
    %80 = vector.broadcast %79 : vector<8x1xf32> to vector<8x8xf32>
    %81 = arith.mulf %78, %80 : vector<8x8xf32>
    %c0_30 = arith.constant 0 : index
    %c24 = arith.constant 24 : index
    %82 = vector.load %arg8[%c0_30, %c24] : memref<8x32xf32, #tpu.memory_space<vmem>>, vector<8x8xf32>
    tpu.vector_store %arg8[%c0_30, %c24], %81 {strides = array<i32>} : memref<8x32xf32, #tpu.memory_space<vmem>>, vector<8x8xf32>,
    %c0_31 = arith.constant 0 : index
    %c0_32 = arith.constant 0 : index
    %83 = vector.load %arg8[%c0_31, %c0_32] : memref<8x32xf32, #tpu.memory_space<vmem>>, vector<8x32xf32>
    %84 = arith.truncf %83 : vector<8x32xf32> to vector<8x32xbf16>
    %c0_33 = arith.constant 0 : index
    %c0_34 = arith.constant 0 : index
    %85 = vector.load %arg6[%c0_33, %c0_34] : memref<32x32xbf16, #tpu.memory_space<vmem>>, vector<32x32xbf16>
    %cst_35 = arith.constant dense<0.000000e+00> : vector<8x32xf32>
    %86 = tpu.matmul %84, %85, %cst_35 {dimension_numbers = #tpu.dot_dimension_numbers<[1], [0], [0], [1], [0, 0, 1, 1], [], []>} : vector<8x32xbf16>, vector<32x32xbf16>, vector<8x32xf32> -> vector<8x32xf32>
    %c0_36 = arith.constant 0 : index
    %c0_37 = arith.constant 0 : index
    %c0_38 = arith.constant 0 : index
    %87 = vector.load %arg7[%c0_36, %c0_37, %c0_38] : memref<1x8x32xf32, #tpu.memory_space<vmem>>, vector<1x8x32xf32>
    %88 = vector.shape_cast %87 : vector<1x8x32xf32> to vector<8x32xf32>
    %89 = vector.shape_cast %86 : vector<8x32xf32> to vector<1x8x32xf32>
    tpu.vector_store %arg7[%c0_36, %c0_37, %c0_38], %89 {strides = array<i32>} : memref<1x8x32xf32, #tpu.memory_space<vmem>>, vector<1x8x32xf32>,
    return
  }
  func.func @transform_0(%arg0: i32, %arg1: i32) -> (i32, i32, i32) {
    %c0_i32 = arith.constant 0 : i32
    %c0_i32_0 = arith.constant 0 : i32
    return %arg0, %arg1, %c0_i32 : i32, i32, i32
  }
  func.func @transform_1(%arg0: i32, %arg1: i32) -> (i32, i32, i32) {
    %c0_i32 = arith.constant 0 : i32
    %c0_i32_0 = arith.constant 0 : i32
    %c0_i32_1 = arith.constant 0 : i32
    return %arg0, %c0_i32, %c0_i32_0 : i32, i32, i32
  }
  func.func @transform_2(%arg0: i32, %arg1: i32) -> (i32, i32) {
    %c0_i32 = arith.constant 0 : i32
    %c0_i32_0 = arith.constant 0 : i32
    %c0_i32_1 = arith.constant 0 : i32
    return %c0_i32, %c0_i32_0 : i32, i32
  }
  func.func @transform_3(%arg0: i32, %arg1: i32) -> (i32, i32) {
    %c0_i32 = arith.constant 0 : i32
    %c0_i32_0 = arith.constant 0 : i32
    %c0_i32_1 = arith.constant 0 : i32
    return %c0_i32, %c0_i32_0 : i32, i32
  }
  func.func @transform_4(%arg0: i32, %arg1: i32) -> (i32, i32) {
    %c0_i32 = arith.constant 0 : i32
    %c0_i32_0 = arith.constant 0 : i32
    %c0_i32_1 = arith.constant 0 : i32
    return %c0_i32, %c0_i32_0 : i32, i32
  }
  func.func @transform_5(%arg0: i32, %arg1: i32) -> (i32, i32, i32) {
    %c0_i32 = arith.constant 0 : i32
    %c0_i32_0 = arith.constant 0 : i32
    return %arg0, %arg1, %c0_i32 : i32, i32, i32
  }
}

</mosaic_0001>

<llo_original>
// kernel: tpu_custom_call.1
$region0: #{tpu_custom_call.1}
  #allocation0 [shape = 'u32[]', space=smem, size = 0x4, offset = 0x4, fixed_abs, tag = 'smem constant byte address 0x4 - core index']
  #allocation1 [shape = 'u32[144,128]{1,0:T(1,128)}', space=vmem, size = 0x12000, scoped, tag = 'internal scratch']
  #allocation2 [shape = 'f32[8,32]{1,0:T(8,128)}', space=vmem, size = 0x1000, scoped, tag = 'scratch operand']
  %s0 = inlined_call_operand.hbm [shape: f32[2,8,32], index: 0, kind: input, shape index: {}]
  %s1 = inlined_call_operand.hbm [shape: f32[2,8,32], index: 1, kind: input, shape index: {}]
  %s2 = inlined_call_operand.hbm [shape: bf16[32,32], index: 2, kind: input, shape index: {}]
  %s3 = inlined_call_operand.hbm [shape: bf16[32,64], index: 3, kind: input, shape index: {}]
  %s4 = inlined_call_operand.hbm [shape: bf16[32,32], index: 4, kind: input, shape index: {}]
  %s5 = inlined_call_operand.hbm [shape: f32[2,8,32], index: 5, kind: output, shape index: {}]
  %s6 = sld [smem:[#allocation0]]
  $region73: #{tpu_custom_call.1} parent=0
    _
  %s8 = ssub.s32 1, %s6
  %s9 = scalar_select 0, %s8, %s6
  $region1: #{tpu_custom_call.1} parent=0
    #allocation3 [shape = 'u8[8192]{0}', space=vmem, size = 0x2000, scoped, tag = 'input window, operand 0']
    #allocation4 [shape = 's32[2]{0}', space=sflag, size = 0x8, scoped, tag = 'scoped memory for tpu_custom_call.1']
    #allocation5 [shape = 's32[2]{0}', space=sflag, size = 0x8, scoped, tag = 'scoped memory for tpu_custom_call.1']
    #allocation6 [shape = 'u8[8192]{0}', space=vmem, size = 0x2000, scoped, tag = 'input window, operand 1']
    #allocation7 [shape = 's32[2]{0}', space=sflag, size = 0x8, scoped, tag = 'scoped memory for tpu_custom_call.1']
    #allocation8 [shape = 'u8[8192]{0}', space=vmem, size = 0x2000, scoped, tag = 'input window, operand 2, single buffered']
    #allocation9 [shape = 'u8[8192]{0}', space=vmem, size = 0x2000, scoped, tag = 'input window, operand 3, single buffered']
    #allocation10 [shape = 's32[1]{0}', space=sflag, size = 0x4, scoped, tag = 'scoped memory for tpu_custom_call.1']
    #allocation11 [shape = 'u8[8192]{0}', space=vmem, size = 0x2000, scoped, tag = 'input window, operand 4, single buffered']
    #allocation12 [shape = 'u8[8192]{0}', space=vmem, size = 0x2000, scoped, tag = 'output window, operand 0']
    %10 = vsyncpa [#allocation4], 0
    %s11 = scalar_lea.sflag [#allocation4], 1
    %12 = vsyncpa %s11, 0
    %13 = vsyncpa [#allocation7], 0
    %s14 = scalar_lea.sflag [#allocation7], 1
    %15 = vsyncpa %s14, 0
    %16 = vsyncpa [#allocation10], 0
    %17 = vsyncpa [#allocation5], 0
    %s18 = scalar_lea.sflag [#allocation5], 1
    %19 = vsyncpa %s18, 0
    loop: start=0, step=1, limit=4
    $region2: #{tpu_custom_call.1} parent=1 // loop_pre_header
      _
    $region3: #{tpu_custom_call.1} parent=1 // loop_header
      %s21 = sphi 0, %s25
      %p22 = scmp.ge.s32.totalorder %s21, 4
      %s28 = sphi 0, %s40
      %s29 = sphi 0, %s36
      %s30 = sphi 0, %s28
      %s31 = sphi 0, %s29
      %s32 = sphi 0, %s30
      %s33 = sphi 0, %s31
      %s45 = sphi 0, %s47
      %s48 = sphi 0, %s45
      %s49 = sphi 0, %s48
      %s65 = sphi 0, %s49
      %s71 = sphi 0, %s73
      %s74 = sphi 0, %s71
      %s75 = sphi 0, %s74
      %s91 = sphi 0, %s75
      %s95 = sphi 0, %s95
      %s97 = sphi 0, %s95
      %s98 = sphi 0, %s97
      %s112 = sphi 0, %s98
      %s116 = sphi 0, %s116
      %s118 = sphi 0, %s116
      %s119 = sphi 0, %s118
      %s133 = sphi 0, %s119
      %s137 = sphi 0, %s137
      %s139 = sphi 0, %s137
      %s140 = sphi 0, %s139
      %s154 = sphi 0, %s140
      %s162 = sphi 0, %s164
      %s165 = sphi 0, %s162
      %s166 = sphi 0, %s165
      %s182 = sphi 0, %s166
    $region4: #{tpu_custom_call.1} parent=1 // loop_header_branch
      %24 = sbr.rel (%p22) target = $region8
    $region5: #{tpu_custom_call.1} parent=1 // loop_body
      %s26 = ssub.s32 %s21, 1
      %s27 = ssub.s32 %s21, 2
      %s34 = sadd.s32 1, %s29
      %p35 = scmp.ge.s32.totalorder %s34, 1
      %s36 = scalar_select %p35, 0, %s34
      %s37 = sadd.s32 1, %s28
      %s38 = scalar_select %p35, %s37, %s28
      %p39 = scmp.ge.s32.totalorder %s38, 2
      %s40 = scalar_select %p39, 0, %s38
      %s41 = ssub.s32 %s28, %s40
      %s42 = ssub.s32 %s29, %s36
      %s43 = sor.u32 %s41, %s42
      %p44 = scmp.eq.s32.totalorder %s43, 0
      %s46 = sadd.s32 %s45, 1
      %s47 = scalar_select %p44, %s45, %s46
      %p50 = pneg %p44
      %p51 = scmp.eq.s32.totalorder %s21, 1
      %p52 = por %p50, %p51
      %p53 = scmp.ne.s32.totalorder %s45, %s48
      %p54 = scmp.eq.s32.totalorder %s21, 0
      %p55 = por %p53, %p54
      %p56 = scmp.ne.s32.totalorder %s45, %s48
      %p57 = scmp.eq.s32.totalorder %s26, 1
      %p58 = por %p56, %p57
      %p59 = scmp.ne.s32.totalorder %s48, %s49
      %p60 = scmp.eq.s32.totalorder %s26, 0
      %p61 = por %p59, %p60
      %p62 = scmp.ne.s32.totalorder %s48, %s49
      %p63 = scmp.eq.s32.totalorder %s27, 1
      %p64 = por %p62, %p63
      %p66 = scmp.ne.s32.totalorder %s49, %s65
      %p67 = scmp.eq.s32.totalorder %s27, 0
      %p68 = por %p66, %p67
      %s69 = ssub.s32 %s28, %s40
      %p70 = scmp.eq.s32.totalorder %s69, 0
      %s72 = sadd.s32 %s71, 1
      %s73 = scalar_select %p70, %s71, %s72
      %p76 = pneg %p70
      %p77 = scmp.eq.s32.totalorder %s21, 1
      %p78 = por %p76, %p77
      %p79 = scmp.ne.s32.totalorder %s71, %s74
      %p80 = scmp.eq.s32.totalorder %s21, 0
      %p81 = por %p79, %p80
      %p82 = scmp.ne.s32.totalorder %s71, %s74
      %p83 = scmp.eq.s32.totalorder %s26, 1
      %p84 = por %p82, %p83
      %p85 = scmp.ne.s32.totalorder %s74, %s75
      %p86 = scmp.eq.s32.totalorder %s26, 0
      %p87 = por %p85, %p86
      %p88 = scmp.ne.s32.totalorder %s74, %s75
      %p89 = scmp.eq.s32.totalorder %s27, 1
      %p90 = por %p88, %p89
      %p92 = scmp.ne.s32.totalorder %s75, %s91
      %p93 = scmp.eq.s32.totalorder %s27, 0
      %p94 = por %p92, %p93
      %s96 = sadd.s32 %s95, 1
      %p99 = scmp.eq.s32.totalorder %s21, 1
      %p100 = scmp.ne.s32.totalorder %s95, %s97
      %p101 = scmp.eq.s32.totalorder %s21, 0
      %p102 = por %p100, %p101
      %p103 = scmp.ne.s32.totalorder %s95, %s97
      %p104 = scmp.eq.s32.totalorder %s26, 1
      %p105 = por %p103, %p104
      %p106 = scmp.ne.s32.totalorder %s97, %s98
      %p107 = scmp.eq.s32.totalorder %s26, 0
      %p108 = por %p106, %p107
      %p109 = scmp.ne.s32.totalorder %s97, %s98
      %p110 = scmp.eq.s32.totalorder %s27, 1
      %p111 = por %p109, %p110
      %p113 = scmp.ne.s32.totalorder %s98, %s112
      %p114 = scmp.eq.s32.totalorder %s27, 0
      %p115 = por %p113, %p114
      %s117 = sadd.s32 %s116, 1
      %p120 = scmp.eq.s32.totalorder %s21, 1
      %p121 = scmp.ne.s32.totalorder %s116, %s118
      %p122 = scmp.eq.s32.totalorder %s21, 0
      %p123 = por %p121, %p122
      %p124 = scmp.ne.s32.totalorder %s116, %s118
      %p125 = scmp.eq.s32.totalorder %s26, 1
      %p126 = por %p124, %p125
      %p127 = scmp.ne.s32.totalorder %s118, %s119
      %p128 = scmp.eq.s32.totalorder %s26, 0
      %p129 = por %p127, %p128
      %p130 = scmp.ne.s32.totalorder %s118, %s119
      %p131 = scmp.eq.s32.totalorder %s27, 1
      %p132 = por %p130, %p131
      %p134 = scmp.ne.s32.totalorder %s119, %s133
      %p135 = scmp.eq.s32.totalorder %s27, 0
      %p136 = por %p134, %p135
      %s138 = sadd.s32 %s137, 1
      %p141 = scmp.eq.s32.totalorder %s21, 1
      %p142 = scmp.ne.s32.totalorder %s137, %s139
      %p143 = scmp.eq.s32.totalorder %s21, 0
      %p144 = por %p142, %p143
      %p145 = scmp.ne.s32.totalorder %s137, %s139
      %p146 = scmp.eq.s32.totalorder %s26, 1
      %p147 = por %p145, %p146
      %p148 = scmp.ne.s32.totalorder %s139, %s140
      %p149 = scmp.eq.s32.totalorder %s26, 0
      %p150 = por %p148, %p149
      %p151 = scmp.ne.s32.totalorder %s139, %s140
      %p152 = scmp.eq.s32.totalorder %s27, 1
      %p153 = por %p151, %p152
      %p155 = scmp.ne.s32.totalorder %s140, %s154
      %p156 = scmp.eq.s32.totalorder %s27, 0
      %p157 = por %p155, %p156
      %s158 = ssub.s32 %s28, %s40
      %s159 = ssub.s32 %s29, %s36
      %s160 = sor.u32 %s158, %s159
      %p161 = scmp.eq.s32.totalorder %s160, 0
      %s163 = sadd.s32 %s162, 1
      %s164 = scalar_select %p161, %s162, %s163
      %p167 = pneg %p161
      %p168 = scmp.eq.s32.totalorder %s21, 1
      %p169 = por %p167, %p168
      %p170 = scmp.ne.s32.totalorder %s162, %s165
      %p171 = scmp.eq.s32.totalorder %s21, 0
      %p172 = por %p170, %p171
      %p173 = scmp.ne.s32.totalorder %s162, %s165
      %p174 = scmp.eq.s32.totalorder %s26, 1
      %p175 = por %p173, %p174
      %p176 = scmp.ne.s32.totalorder %s165, %s166
      %p177 = scmp.eq.s32.totalorder %s26, 0
      %p178 = por %p176, %p177
      %p179 = scmp.ne.s32.totalorder %s165, %s166
      %p180 = scmp.eq.s32.totalorder %s27, 1
      %p181 = por %p179, %p180
      %p183 = scmp.ne.s32.totalorder %s166, %s182
      %p184 = scmp.eq.s32.totalorder %s27, 0
      %p185 = por %p183, %p184
      %p186 = scmp.le.s32.totalorder 1, %s21
      %p187 = scmp.lt.s32.totalorder %s21, 3
      %p188 = pnand %p186, %p187
      %p189 = pneg %p188
      // Predicated region
      $region9: #{tpu_custom_call.1} parent=5 // pred_check
        _
      $region10: #{tpu_custom_call.1} parent=5 // pred_check_branch
        %191 = sbr.rel (%p188) target = $region12
      $region11: #{tpu_custom_call.1} parent=5 // pred_region
        %s192 = ssub.s32 %s21, 1
        // Predicated region
        $region13: #{tpu_custom_call.1} parent=11 // pred_check
          %p193 = pneg %p108
        $region14: #{tpu_custom_call.1} parent=11 // pred_check_branch
          %195 = sbr.rel (%p193) target = $region16
        $region15: #{tpu_custom_call.1} parent=11 // pred_region
          %s197 = ssub.s32 256, 256
          %198 = vsyncadd [#allocation7], %s197
          %s199 = sshll.u32 [#allocation8], 4
          %s200 = int_to_ptr.vmem [resolvable:$true] %s199
          %205 = dma.hbm_to_vmem [thread:$0]  %s2, 256, %s200, [#allocation7], 64, 64, 4
        $region16: #{tpu_custom_call.1} parent=11 // pred_fallthru
          _
        // Predicated region
        $region17: #{tpu_custom_call.1} parent=11 // pred_check
          %p206 = pneg %p129
        $region18: #{tpu_custom_call.1} parent=11 // pred_check_branch
          %208 = sbr.rel (%p206) target = $region20
        $region19: #{tpu_custom_call.1} parent=11 // pred_region
          %s210 = ssub.s32 256, 256
          %211 = vsyncadd [#allocation10], %s210
          %s212 = sshll.u32 [#allocation9], 4
          %s213 = int_to_ptr.vmem [resolvable:$true] %s212
          %218 = dma.hbm_to_vmem [thread:$0]  %s3, 256, %s213, [#allocation10], 64, 64, 4
        $region20: #{tpu_custom_call.1} parent=11 // pred_fallthru
          _
        // Predicated region
        $region21: #{tpu_custom_call.1} parent=11 // pred_check
          %p219 = pneg %p150
        $region22: #{tpu_custom_call.1} parent=11 // pred_check_branch
          %221 = sbr.rel (%p219) target = $region24
        $region23: #{tpu_custom_call.1} parent=11 // pred_region
          %s223 = ssub.s32 256, 256
          %224 = vsyncadd [#allocation10], %s223
          %s225 = sshll.u32 [#allocation11], 4
          %s226 = int_to_ptr.vmem [resolvable:$true] %s225
          %231 = dma.hbm_to_vmem [thread:$0]  %s4, 256, %s226, [#allocation10], 64, 64, 4
        $region24: #{tpu_custom_call.1} parent=11 // pred_fallthru
          _
      $region12: #{tpu_custom_call.1} parent=5 // pred_fallthru
        _
      %p232 = scmp.lt.s32.totalorder %s21, 2
      // Predicated region
      $region25: #{tpu_custom_call.1} parent=5 // pred_check
        %p233 = pneg %p232
      $region26: #{tpu_custom_call.1} parent=5 // pred_check_branch
        %235 = sbr.rel (%p233) target = $region28
      $region27: #{tpu_custom_call.1} parent=5 // pred_region
        // Predicated region
        $region29: #{tpu_custom_call.1} parent=27 // pred_check
          %p236 = pneg %p55
        $region30: #{tpu_custom_call.1} parent=27 // pred_check_branch
          %238 = sbr.rel (%p236) target = $region32
        $region31: #{tpu_custom_call.1} parent=27 // pred_region
          %s239 = sand.u32 %s45, 1
          %s240 = scalar_lea.sflag [#allocation4], %s239
          %s241 = sand.u32 %s45, 1
          %s242 = smul.addr %s241, 8
          %s243 = scalar_lea.vmem [#allocation3], %s242
          %s245 = ssub.s32 128, 128
          %246 = vsyncadd %s240, %s245
          %s247 = sadd.s32 %s29, %s28
          %s248 = smul.addr %s247, 128
          %s249 = scalar_lea.hbm %s0, %s248
          %s251 = sshll.u32 %s243, 4
          %s252 = int_to_ptr.vmem [resolvable:$true] %s251
          %254 = dma.hbm_to_vmem [thread:$0]  %s249, 128, %s252, %s240
        $region32: #{tpu_custom_call.1} parent=27 // pred_fallthru
          _
        // Predicated region
        $region33: #{tpu_custom_call.1} parent=27 // pred_check
          %p255 = pneg %p81
        $region34: #{tpu_custom_call.1} parent=27 // pred_check_branch
          %257 = sbr.rel (%p255) target = $region36
        $region35: #{tpu_custom_call.1} parent=27 // pred_region
          %s258 = sand.u32 %s21, 1
          %s259 = scalar_lea.sflag [#allocation7], %s258
          %s260 = sand.u32 %s71, 1
          %s261 = smul.addr %s260, 8
          %s262 = scalar_lea.vmem [#allocation6], %s261
          %s264 = ssub.s32 128, 128
          %265 = vsyncadd %s259, %s264
          %s266 = smul.addr %s28, 128
          %s267 = scalar_lea.hbm %s1, %s266
          %s269 = sshll.u32 %s262, 4
          %s270 = int_to_ptr.vmem [resolvable:$true] %s269
          %272 = dma.hbm_to_vmem [thread:$0]  %s267, 128, %s270, %s259
        $region36: #{tpu_custom_call.1} parent=27 // pred_fallthru
          _
      $region28: #{tpu_custom_call.1} parent=5 // pred_fallthru
        _
      %p273 = scmp.le.s32.totalorder 1, %s21
      %p274 = scmp.lt.s32.totalorder %s21, 3
      %p275 = pnand %p273, %p274
      %p276 = pneg %p275
      // Predicated region
      $region37: #{tpu_custom_call.1} parent=5 // pred_check
        _
      $region38: #{tpu_custom_call.1} parent=5 // pred_check_branch
        %278 = sbr.rel (%p275) target = $region40
      $region39: #{tpu_custom_call.1} parent=5 // pred_region
        %s279 = ssub.s32 %s21, 1
        %s280 = sand.u32 %s48, 1
        %s281 = scalar_lea.sflag [#allocation4], %s280
        %s282 = sand.u32 %s48, 1
        %s283 = smul.addr %s282, 8
        %s284 = scalar_lea.vmem [#allocation3], %s283
        // Predicated region
        $region41: #{tpu_custom_call.1} parent=39 // pred_check
          %p285 = pneg %p61
        $region42: #{tpu_custom_call.1} parent=39 // pred_check_branch
          %287 = sbr.rel (%p285) target = $region44
        $region43: #{tpu_custom_call.1} parent=39 // pred_region
          %288 = dma.done %s281, 128
        $region44: #{tpu_custom_call.1} parent=39 // pred_fallthru
          _
        %s289 = sand.u32 %s26, 1
        %s290 = scalar_lea.sflag [#allocation7], %s289
        %s291 = sand.u32 %s74, 1
        %s292 = smul.addr %s291, 8
        %s293 = scalar_lea.vmem [#allocation6], %s292
        // Predicated region
        $region45: #{tpu_custom_call.1} parent=39 // pred_check
          %p294 = pneg %p87
        $region46: #{tpu_custom_call.1} parent=39 // pred_check_branch
          %296 = sbr.rel (%p294) target = $region48
        $region47: #{tpu_custom_call.1} parent=39 // pred_region
          %297 = dma.done %s290, 128
        $region48: #{tpu_custom_call.1} parent=39 // pred_fallthru
          _
        // Predicated region
        $region49: #{tpu_custom_call.1} parent=39 // pred_check
          %p298 = pneg %p108
        $region50: #{tpu_custom_call.1} parent=39 // pred_check_branch
          %300 = sbr.rel (%p298) target = $region52
        $region51: #{tpu_custom_call.1} parent=39 // pred_region
          %301 = dma.done [#allocation7], 256
        $region52: #{tpu_custom_call.1} parent=39 // pred_fallthru
          _
        // Predicated region
        $region53: #{tpu_custom_call.1} parent=39 // pred_check
          %p302 = pneg %p129
        $region54: #{tpu_custom_call.1} parent=39 // pred_check_branch
          %304 = sbr.rel (%p302) target = $region56
        $region55: #{tpu_custom_call.1} parent=39 // pred_region
          %305 = dma.done [#allocation10], 256
        $region56: #{tpu_custom_call.1} parent=39 // pred_fallthru
          _
        // Predicated region
        $region57: #{tpu_custom_call.1} parent=39 // pred_check
          %p306 = pneg %p150
        $region58: #{tpu_custom_call.1} parent=39 // pred_check_branch
          %308 = sbr.rel (%p306) target = $region60
        $region59: #{tpu_custom_call.1} parent=39 // pred_region
          %309 = dma.done [#allocation10], 256
        $region60: #{tpu_custom_call.1} parent=39 // pred_fallthru
          _
        %s310 = sand.u32 %s48, 1
        %s311 = scalar_lea.sflag [#allocation4], %s310
        %s312 = sand.u32 %s48, 1
        %s313 = smul.addr %s312, 8
        %s314 = scalar_lea.vmem [#allocation3], %s313
        %p315 = pneg %p61
        %p316 = pneg %p58
        %s317 = sand.u32 %s26, 1
        %s318 = scalar_lea.sflag [#allocation7], %s317
        %s319 = sand.u32 %s74, 1
        %s320 = smul.addr %s319, 8
        %s321 = scalar_lea.vmem [#allocation6], %s320
        %p322 = pneg %p87
        %p323 = pneg %p84
        %p324 = pneg %p108
        %p325 = pneg %p105
        %p326 = pneg %p129
        %p327 = pneg %p126
        %p328 = pneg %p150
        %p329 = pneg %p147
        %p330 = pneg %p178
        %p331 = pneg %p175
        %s332 = sand.u32 %s165, 1
        %s333 = scalar_lea.sflag [#allocation5], %s332
        %s334 = sand.u32 %s165, 1
        %s335 = smul.addr %s334, 8
        %s336 = scalar_lea.vmem [#allocation12], %s335
        %v338 = vld [vmem:[%s284] sm:$0xff]
        %v339 = vpack.c.bf16 %v338, %v338
        %v340 = vld [vmem:[%s293] sm:$0xff]
        %v341 = vpack.c.bf16 %v340, %v340
        %v342 = vld [vmem:[#allocation8] sm:$0xf]
        %v343 = vld [vmem:[#allocation8 + $0x4] sm:$0xf]
        %v344 = vld [vmem:[#allocation8 + $0x8] sm:$0xf]
        %v345 = vld [vmem:[#allocation8 + $0xc] sm:$0xf]
        %v350 = vunpack.c.l.b16 %v342
        %v351 = vunpack.c.l.b16 %v343
        %v352 = vunpack.c.l.b16 %v344
        %v353 = vunpack.c.l.b16 %v345
        %v354 = vpack.c.b16 %v351, %v350
        %v355 = vpack.c.b16 %v353, %v352
        %vm358 = vcmask 261120
        %v360 = vsel %vm358, %v339, 0
        %362 = vmatprep.subr.bf16.mxu0 0
        %363 = vmatpush1.bf16.msra.mxu0 %v354
        %364 = vmatprep.subr.bf16.mxu0 0
        %365 = vmatpush1.bf16.msra.mxu0 %v355
        %366 = vmatprep.subr.bf16.mxu0 0
        %367 = vmatpush1.bf16.msra.mxu0 0
        %368 = vmatprep.subr.bf16.mxu0 0
        %369 = vmatpush1.bf16.msra.mxu0 0
        %370 = vmatprep.subr.bf16.mxu0 0
        %371 = vmatpush1.bf16.msra.mxu0 0
        %372 = vmatprep.subr.bf16.mxu0 0
        %373 = vmatpush1.bf16.msra.mxu0 0
        %374 = vmatprep.subr.bf16.mxu0 0
        %375 = vmatpush1.bf16.msra.mxu0 0
        %376 = vmatprep.subr.bf16.mxu0 0
        %377 = vmatpush1.bf16.msra.mxu0 0
        %378 = vmatprep.subr.bf16.mxu0 0
        %379 = vmatpush1.bf16.msra.mxu0 0
        %380 = vmatprep.subr.bf16.mxu0 0
        %381 = vmatpush1.bf16.msra.mxu0 0
        %382 = vmatprep.subr.bf16.mxu0 0
        %383 = vmatpush1.bf16.msra.mxu0 0
        %384 = vmatprep.subr.bf16.mxu0 0
        %385 = vmatpush1.bf16.msra.mxu0 0
        %386 = vmatprep.subr.bf16.mxu0 0
        %387 = vmatpush1.bf16.msra.mxu0 0
        %388 = vmatprep.subr.bf16.mxu0 0
        %389 = vmatpush1.bf16.msra.mxu0 0
        %390 = vmatprep.subr.bf16.mxu0 0
        %391 = vmatpush1.bf16.msra.mxu0 0
        %392 = vmatprep.subr.bf16.mxu0 0
        %393 = vmatpush1.bf16.msra.mxu0 0
        %394 = vmatprep.mubr.bf16.mxu0 0
        %395 = vmatmul.mubr.bf16.gmra.mrb[0].mxu0 %v360
        %v396 = vpop.f32.mrb[0].mxu0
        %v397 = vadd.f32 0.0, %v396
        %v398 = vpop.f32.mrb[0].mxu0
        %v399 = vpop.f32.mrb[0].mxu0
        %v400 = vpop.f32.mrb[0].mxu0
        %401 = vdwg.mxu0
        %v402 = vld [vmem:[#allocation9] sm:$0xf]
        %v403 = vld [vmem:[#allocation9 + $0x4] sm:$0xf]
        %v404 = vld [vmem:[#allocation9 + $0x8] sm:$0xf]
        %v405 = vld [vmem:[#allocation9 + $0xc] sm:$0xf]
        %v410 = vunpack.c.l.b16 %v402
        %v411 = vunpack.c.l.b16 %v403
        %v412 = vunpack.c.l.b16 %v404
        %v413 = vunpack.c.l.b16 %v405
        %v414 = vpack.c.b16 %v411, %v410
        %v415 = vpack.c.b16 %v413, %v412
        %v419 = vsel %vm358, %v341, 0
        %421 = vmatprep.subr.bf16.mxu0 0
        %422 = vmatpush1.bf16.msra.mxu0 %v414
        %423 = vmatprep.subr.bf16.mxu0 0
        %424 = vmatpush1.bf16.msra.mxu0 %v415
        %425 = vmatprep.subr.bf16.mxu0 0
        %426 = vmatpush1.bf16.msra.mxu0 0
        %427 = vmatprep.subr.bf16.mxu0 0
        %428 = vmatpush1.bf16.msra.mxu0 0
        %429 = vmatprep.subr.bf16.mxu0 0
        %430 = vmatpush1.bf16.msra.mxu0 0
        %431 = vmatprep.subr.bf16.mxu0 0
        %432 = vmatpush1.bf16.msra.mxu0 0
        %433 = vmatprep.subr.bf16.mxu0 0
        %434 = vmatpush1.bf16.msra.mxu0 0
        %435 = vmatprep.subr.bf16.mxu0 0
        %436 = vmatpush1.bf16.msra.mxu0 0
        %437 = vmatprep.subr.bf16.mxu0 0
        %438 = vmatpush1.bf16.msra.mxu0 0
        %439 = vmatprep.subr.bf16.mxu0 0
        %440 = vmatpush1.bf16.msra.mxu0 0
        %441 = vmatprep.subr.bf16.mxu0 0
        %442 = vmatpush1.bf16.msra.mxu0 0
        %443 = vmatprep.subr.bf16.mxu0 0
        %444 = vmatpush1.bf16.msra.mxu0 0
        %445 = vmatprep.subr.bf16.mxu0 0
        %446 = vmatpush1.bf16.msra.mxu0 0
        %447 = vmatprep.subr.bf16.mxu0 0
        %448 = vmatpush1.bf16.msra.mxu0 0
        %449 = vmatprep.subr.bf16.mxu0 0
        %450 = vmatpush1.bf16.msra.mxu0 0
        %451 = vmatprep.subr.bf16.mxu0 0
        %452 = vmatpush1.bf16.msra.mxu0 0
        %453 = vmatprep.mubr.bf16.mxu0 0
        %454 = vmatmul.mubr.bf16.gmra.mrb[0].mxu0 %v419
        %v455 = vpop.f32.mrb[0].mxu0
        %v456 = vadd.f32 0.0, %v455
        %v457 = vpop.f32.mrb[0].mxu0
        %v458 = vpop.f32.mrb[0].mxu0
        %v459 = vpop.f32.mrb[0].mxu0
        %460 = vdwg.mxu0
        %v461 = vpack.c.bf16 %v397, %v397
        %v462 = vpack.c.bf16 %v456, %v456
        %vm463 = vcmask 64512
        %v465 = vsel %vm463, %v461, 0
        %v468 = vsel %vm463, %v462, 0
        %470 = vmatprep.subr.bf16.mxu0 0
        %471 = vmatpush1.bf16.xpose.msra.mxu0 %v468
        %472 = vmatprep.subr.bf16.mxu0 0
        %473 = vmatpush1.bf16.xpose.msra.mxu0 0
        %474 = vmatprep.subr.bf16.mxu0 0
        %475 = vmatpush1.bf16.xpose.msra.mxu0 0
        %476 = vmatprep.subr.bf16.mxu0 0
        %477 = vmatpush1.bf16.xpose.msra.mxu0 0
        %478 = vmatprep.subr.bf16.mxu0 0
        %479 = vmatpush1.bf16.xpose.msra.mxu0 0
        %480 = vmatprep.subr.bf16.mxu0 0
        %481 = vmatpush1.bf16.xpose.msra.mxu0 0
        %482 = vmatprep.subr.bf16.mxu0 0
        %483 = vmatpush1.bf16.xpose.msra.mxu0 0
        %484 = vmatprep.subr.bf16.mxu0 0
        %485 = vmatpush1.bf16.xpose.msra.mxu0 0
        %486 = vmatprep.subr.bf16.mxu0 0
        %487 = vmatpush1.bf16.xpose.msra.mxu0 0
        %488 = vmatprep.subr.bf16.mxu0 0
        %489 = vmatpush1.bf16.xpose.msra.mxu0 0
        %490 = vmatprep.subr.bf16.mxu0 0
        %491 = vmatpush1.bf16.xpose.msra.mxu0 0
        %492 = vmatprep.subr.bf16.mxu0 0
        %493 = vmatpush1.bf16.xpose.msra.mxu0 0
        %494 = vmatprep.subr.bf16.mxu0 0
        %495 = vmatpush1.bf16.xpose.msra.mxu0 0
        %496 = vmatprep.subr.bf16.mxu0 0
        %497 = vmatpush1.bf16.xpose.msra.mxu0 0
        %498 = vmatprep.subr.bf16.mxu0 0
        %499 = vmatpush1.bf16.xpose.msra.mxu0 0
        %500 = vmatprep.subr.bf16.mxu0 0
        %501 = vmatpush1.bf16.xpose.msra.mxu0 0
        %502 = vmatprep.mubr.bf16.mxu0 0
        %503 = vmatmul.mubr.bf16.gmra.mrb[0].mxu0 %v465
        %v504 = vpop.f32.mrb[0].mxu0
        %v505 = vadd.f32 0.0, %v504
        %v506 = vpop.f32.mrb[0].mxu0
        %v507 = vpop.f32.mrb[0].mxu0
        %v508 = vpop.f32.mrb[0].mxu0
        %509 = vdwg.mxu0
        %v510 = vsel %vm463, %v505, -inf
        %511 = vmax.xlane.f32.xlu0 %v510
        %v512 = vpop.xlane.xlu0 %511
        %v513 = vsub.f32 %v505, %v512
        %v514 = vmul.f32 %v513, 1.442695
        %v515 = vpow.pop %v514
        %v516 = vsel %vm463, %v515, 0.0
        %517 = vadd.xlane.f32.xlu0 %v516
        %v518 = vpop.xlane.xlu0 %517
        %v519 = vpack.c.bf16 %v515, %v515
        %521 = vrot.lane.b32.xlu0 %v462, 96
        %v522 = vpop.permute.xlu0 %521
        %v524 = vsel %vm463, %v519, 0
        %vm526 = vcmask 1043456
        %v528 = vsel %vm526, %v522, 0
        %530 = vmatprep.subr.bf16.mxu0 0
        %531 = vmatpush1.bf16.msra.mxu0 %v528
        %532 = vmatprep.subr.bf16.mxu0 0
        %533 = vmatpush1.bf16.msra.mxu0 0
        %534 = vmatprep.subr.bf16.mxu0 0
        %535 = vmatpush1.bf16.msra.mxu0 0
        %536 = vmatprep.subr.bf16.mxu0 0
        %537 = vmatpush1.bf16.msra.mxu0 0
        %538 = vmatprep.subr.bf16.mxu0 0
        %539 = vmatpush1.bf16.msra.mxu0 0
        %540 = vmatprep.subr.bf16.mxu0 0
        %541 = vmatpush1.bf16.msra.mxu0 0
        %542 = vmatprep.subr.bf16.mxu0 0
        %543 = vmatpush1.bf16.msra.mxu0 0
        %544 = vmatprep.subr.bf16.mxu0 0
        %545 = vmatpush1.bf16.msra.mxu0 0
        %546 = vmatprep.subr.bf16.mxu0 0
        %547 = vmatpush1.bf16.msra.mxu0 0
        %548 = vmatprep.subr.bf16.mxu0 0
        %549 = vmatpush1.bf16.msra.mxu0 0
        %550 = vmatprep.subr.bf16.mxu0 0
        %551 = vmatpush1.bf16.msra.mxu0 0
        %552 = vmatprep.subr.bf16.mxu0 0
        %553 = vmatpush1.bf16.msra.mxu0 0
        %554 = vmatprep.subr.bf16.mxu0 0
        %555 = vmatpush1.bf16.msra.mxu0 0
        %556 = vmatprep.subr.bf16.mxu0 0
        %557 = vmatpush1.bf16.msra.mxu0 0
        %558 = vmatprep.subr.bf16.mxu0 0
        %559 = vmatpush1.bf16.msra.mxu0 0
        %560 = vmatprep.subr.bf16.mxu0 0
        %561 = vmatpush1.bf16.msra.mxu0 0
        %562 = vmatprep.mubr.bf16.mxu0 0
        %563 = vmatmul.mubr.bf16.gmra.mrb[0].mxu0 %v524
        %v564 = vpop.f32.mrb[0].mxu0
        %v565 = vadd.f32 0.0, %v564
        %v566 = vpop.f32.mrb[0].mxu0
        %v567 = vpop.f32.mrb[0].mxu0
        %v568 = vpop.f32.mrb[0].mxu0
        %569 = vdwg.mxu0
        %v570 = vrcp.pop %v518
        %v571 = vmul.f32 %v565, %v570
        %572 = vst.msk [vmem:[#allocation2] sm:$0xff] %vm463, %v571
        %574 = vrot.lane.b32.xlu0 %v461, 120
        %v575 = vpop.permute.xlu0 %574
        %576 = vrot.lane.b32.xlu0 %v462, 120
        %v577 = vpop.permute.xlu0 %576
        %v579 = vsel %vm463, %v575, 0
        %v582 = vsel %vm463, %v577, 0
        %584 = vmatprep.subr.bf16.mxu0 0
        %585 = vmatpush1.bf16.xpose.msra.mxu0 %v582
        %586 = vmatprep.subr.bf16.mxu0 0
        %587 = vmatpush1.bf16.xpose.msra.mxu0 0
        %588 = vmatprep.subr.bf16.mxu0 0
        %589 = vmatpush1.bf16.xpose.msra.mxu0 0
        %590 = vmatprep.subr.bf16.mxu0 0
        %591 = vmatpush1.bf16.xpose.msra.mxu0 0
        %592 = vmatprep.subr.bf16.mxu0 0
        %593 = vmatpush1.bf16.xpose.msra.mxu0 0
        %594 = vmatprep.subr.bf16.mxu0 0
        %595 = vmatpush1.bf16.xpose.msra.mxu0 0
        %596 = vmatprep.subr.bf16.mxu0 0
        %597 = vmatpush1.bf16.xpose.msra.mxu0 0
        %598 = vmatprep.subr.bf16.mxu0 0
        %599 = vmatpush1.bf16.xpose.msra.mxu0 0
        %600 = vmatprep.subr.bf16.mxu0 0
        %601 = vmatpush1.bf16.xpose.msra.mxu0 0
        %602 = vmatprep.subr.bf16.mxu0 0
        %603 = vmatpush1.bf16.xpose.msra.mxu0 0
        %604 = vmatprep.subr.bf16.mxu0 0
        %605 = vmatpush1.bf16.xpose.msra.mxu0 0
        %606 = vmatprep.subr.bf16.mxu0 0
        %607 = vmatpush1.bf16.xpose.msra.mxu0 0
        %608 = vmatprep.subr.bf16.mxu0 0
        %609 = vmatpush1.bf16.xpose.msra.mxu0 0
        %610 = vmatprep.subr.bf16.mxu0 0
        %611 = vmatpush1.bf16.xpose.msra.mxu0 0
        %612 = vmatprep.subr.bf16.mxu0 0
        %613 = vmatpush1.bf16.xpose.msra.mxu0 0
        %614 = vmatprep.subr.bf16.mxu0 0
        %615 = vmatpush1.bf16.xpose.msra.mxu0 0
        %616 = vmatprep.mubr.bf16.mxu0 0
        %617 = vmatmul.mubr.bf16.gmra.mrb[0].mxu0 %v579
        %v618 = vpop.f32.mrb[0].mxu0
        %v619 = vadd.f32 0.0, %v618
        %v620 = vpop.f32.mrb[0].mxu0
        %v621 = vpop.f32.mrb[0].mxu0
        %v622 = vpop.f32.mrb[0].mxu0
        %623 = vdwg.mxu0
        %v624 = vsel %vm463, %v619, -inf
        %625 = vmax.xlane.f32.xlu0 %v624
        %v626 = vpop.xlane.xlu0 %625
        %v627 = vsub.f32 %v619, %v626
        %v628 = vmul.f32 %v627, 1.442695
        %v629 = vpow.pop %v628
        %v630 = vsel %vm463, %v629, 0.0
        %631 = vadd.xlane.f32.xlu0 %v630
        %v632 = vpop.xlane.xlu0 %631
        %v633 = vpack.c.bf16 %v629, %v629
        %634 = vrot.lane.b32.xlu0 %v462, 88
        %v635 = vpop.permute.xlu0 %634
        %v637 = vsel %vm463, %v633, 0
        %v640 = vsel %vm526, %v635, 0
        %642 = vmatprep.subr.bf16.mxu0 0
        %643 = vmatpush1.bf16.msra.mxu0 %v640
        %644 = vmatprep.subr.bf16.mxu0 0
        %645 = vmatpush1.bf16.msra.mxu0 0
        %646 = vmatprep.subr.bf16.mxu0 0
        %647 = vmatpush1.bf16.msra.mxu0 0
        %648 = vmatprep.subr.bf16.mxu0 0
        %649 = vmatpush1.bf16.msra.mxu0 0
        %650 = vmatprep.subr.bf16.mxu0 0
        %651 = vmatpush1.bf16.msra.mxu0 0
        %652 = vmatprep.subr.bf16.mxu0 0
        %653 = vmatpush1.bf16.msra.mxu0 0
        %654 = vmatprep.subr.bf16.mxu0 0
        %655 = vmatpush1.bf16.msra.mxu0 0
        %656 = vmatprep.subr.bf16.mxu0 0
        %657 = vmatpush1.bf16.msra.mxu0 0
        %658 = vmatprep.subr.bf16.mxu0 0
        %659 = vmatpush1.bf16.msra.mxu0 0
        %660 = vmatprep.subr.bf16.mxu0 0
        %661 = vmatpush1.bf16.msra.mxu0 0
        %662 = vmatprep.subr.bf16.mxu0 0
        %663 = vmatpush1.bf16.msra.mxu0 0
        %664 = vmatprep.subr.bf16.mxu0 0
        %665 = vmatpush1.bf16.msra.mxu0 0
        %666 = vmatprep.subr.bf16.mxu0 0
        %667 = vmatpush1.bf16.msra.mxu0 0
        %668 = vmatprep.subr.bf16.mxu0 0
        %669 = vmatpush1.bf16.msra.mxu0 0
        %670 = vmatprep.subr.bf16.mxu0 0
        %671 = vmatpush1.bf16.msra.mxu0 0
        %672 = vmatprep.subr.bf16.mxu0 0
        %673 = vmatpush1.bf16.msra.mxu0 0
        %674 = vmatprep.mubr.bf16.mxu0 0
        %675 = vmatmul.mubr.bf16.gmra.mrb[0].mxu0 %v637
        %v676 = vpop.f32.mrb[0].mxu0
        %v677 = vadd.f32 0.0, %v676
        %v678 = vpop.f32.mrb[0].mxu0
        %v679 = vpop.f32.mrb[0].mxu0
        %v680 = vpop.f32.mrb[0].mxu0
        %681 = vdwg.mxu0
        %v682 = vrcp.pop %v632
        %v683 = vmul.f32 %v677, %v682
        %685 = vrot.lane.b32.xlu0 %v683, 8
        %v686 = vpop.permute.xlu0 %685
        %vm688 = vcmask 130112
        %689 = vst.msk [vmem:[#allocation2] sm:$0xff] %vm688, %v686
        %690 = vrot.lane.b32.xlu0 %v461, 112
        %v691 = vpop.permute.xlu0 %690
        %692 = vrot.lane.b32.xlu0 %v462, 112
        %v693 = vpop.permute.xlu0 %692
        %v695 = vsel %vm463, %v691, 0
        %v698 = vsel %vm463, %v693, 0
        %700 = vmatprep.subr.bf16.mxu0 0
        %701 = vmatpush1.bf16.xpose.msra.mxu0 %v698
        %702 = vmatprep.subr.bf16.mxu0 0
        %703 = vmatpush1.bf16.xpose.msra.mxu0 0
        %704 = vmatprep.subr.bf16.mxu0 0
        %705 = vmatpush1.bf16.xpose.msra.mxu0 0
        %706 = vmatprep.subr.bf16.mxu0 0
        %707 = vmatpush1.bf16.xpose.msra.mxu0 0
        %708 = vmatprep.subr.bf16.mxu0 0
        %709 = vmatpush1.bf16.xpose.msra.mxu0 0
        %710 = vmatprep.subr.bf16.mxu0 0
        %711 = vmatpush1.bf16.xpose.msra.mxu0 0
        %712 = vmatprep.subr.bf16.mxu0 0
        %713 = vmatpush1.bf16.xpose.msra.mxu0 0
        %714 = vmatprep.subr.bf16.mxu0 0
        %715 = vmatpush1.bf16.xpose.msra.mxu0 0
        %716 = vmatprep.subr.bf16.mxu0 0
        %717 = vmatpush1.bf16.xpose.msra.mxu0 0
        %718 = vmatprep.subr.bf16.mxu0 0
        %719 = vmatpush1.bf16.xpose.msra.mxu0 0
        %720 = vmatprep.subr.bf16.mxu0 0
        %721 = vmatpush1.bf16.xpose.msra.mxu0 0
        %722 = vmatprep.subr.bf16.mxu0 0
        %723 = vmatpush1.bf16.xpose.msra.mxu0 0
        %724 = vmatprep.subr.bf16.mxu0 0
        %725 = vmatpush1.bf16.xpose.msra.mxu0 0
        %726 = vmatprep.subr.bf16.mxu0 0
        %727 = vmatpush1.bf16.xpose.msra.mxu0 0
        %728 = vmatprep.subr.bf16.mxu0 0
        %729 = vmatpush1.bf16.xpose.msra.mxu0 0
        %730 = vmatprep.subr.bf16.mxu0 0
        %731 = vmatpush1.bf16.xpose.msra.mxu0 0
        %732 = vmatprep.mubr.bf16.mxu0 0
        %733 = vmatmul.mubr.bf16.gmra.mrb[0].mxu0 %v695
        %v734 = vpop.f32.mrb[0].mxu0
        %v735 = vadd.f32 0.0, %v734
        %v736 = vpop.f32.mrb[0].mxu0
        %v737 = vpop.f32.mrb[0].mxu0
        %v738 = vpop.f32.mrb[0].mxu0
        %739 = vdwg.mxu0
        %v740 = vsel %vm463, %v735, -inf
        %741 = vmax.xlane.f32.xlu0 %v740
        %v742 = vpop.xlane.xlu0 %741
        %v743 = vsub.f32 %v735, %v742
        %v744 = vmul.f32 %v743, 1.442695
        %v745 = vpow.pop %v744
        %v746 = vsel %vm463, %v745, 0.0
        %747 = vadd.xlane.f32.xlu0 %v746
        %v748 = vpop.xlane.xlu0 %747
        %v749 = vpack.c.bf16 %v745, %v745
        %750 = vrot.lane.b32.xlu0 %v462, 80
        %v751 = vpop.permute.xlu0 %750
        %v753 = vsel %vm463, %v749, 0
        %v756 = vsel %vm526, %v751, 0
        %758 = vmatprep.subr.bf16.mxu0 0
        %759 = vmatpush1.bf16.msra.mxu0 %v756
        %760 = vmatprep.subr.bf16.mxu0 0
        %761 = vmatpush1.bf16.msra.mxu0 0
        %762 = vmatprep.subr.bf16.mxu0 0
        %763 = vmatpush1.bf16.msra.mxu0 0
        %764 = vmatprep.subr.bf16.mxu0 0
        %765 = vmatpush1.bf16.msra.mxu0 0
        %766 = vmatprep.subr.bf16.mxu0 0
        %767 = vmatpush1.bf16.msra.mxu0 0
        %768 = vmatprep.subr.bf16.mxu0 0
        %769 = vmatpush1.bf16.msra.mxu0 0
        %770 = vmatprep.subr.bf16.mxu0 0
        %771 = vmatpush1.bf16.msra.mxu0 0
        %772 = vmatprep.subr.bf16.mxu0 0
        %773 = vmatpush1.bf16.msra.mxu0 0
        %774 = vmatprep.subr.bf16.mxu0 0
        %775 = vmatpush1.bf16.msra.mxu0 0
        %776 = vmatprep.subr.bf16.mxu0 0
        %777 = vmatpush1.bf16.msra.mxu0 0
        %778 = vmatprep.subr.bf16.mxu0 0
        %779 = vmatpush1.bf16.msra.mxu0 0
        %780 = vmatprep.subr.bf16.mxu0 0
        %781 = vmatpush1.bf16.msra.mxu0 0
        %782 = vmatprep.subr.bf16.mxu0 0
        %783 = vmatpush1.bf16.msra.mxu0 0
        %784 = vmatprep.subr.bf16.mxu0 0
        %785 = vmatpush1.bf16.msra.mxu0 0
        %786 = vmatprep.subr.bf16.mxu0 0
        %787 = vmatpush1.bf16.msra.mxu0 0
        %788 = vmatprep.subr.bf16.mxu0 0
        %789 = vmatpush1.bf16.msra.mxu0 0
        %790 = vmatprep.mubr.bf16.mxu0 0
        %791 = vmatmul.mubr.bf16.gmra.mrb[0].mxu0 %v753
        %v792 = vpop.f32.mrb[0].mxu0
        %v793 = vadd.f32 0.0, %v792
        %v794 = vpop.f32.mrb[0].mxu0
        %v795 = vpop.f32.mrb[0].mxu0
        %v796 = vpop.f32.mrb[0].mxu0
        %797 = vdwg.mxu0
        %v798 = vrcp.pop %v748
        %v799 = vmul.f32 %v793, %v798
        %801 = vrot.lane.b32.xlu0 %v799, 16
        %v802 = vpop.permute.xlu0 %801
        %vm804 = vcmask 195712
        %805 = vst.msk [vmem:[#allocation2] sm:$0xff] %vm804, %v802
        %806 = vrot.lane.b32.xlu0 %v461, 104
        %v807 = vpop.permute.xlu0 %806
        %808 = vrot.lane.b32.xlu0 %v462, 104
        %v809 = vpop.permute.xlu0 %808
        %v811 = vsel %vm463, %v807, 0
        %v814 = vsel %vm463, %v809, 0
        %816 = vmatprep.subr.bf16.mxu0 0
        %817 = vmatpush1.bf16.xpose.msra.mxu0 %v814
        %818 = vmatprep.subr.bf16.mxu0 0
        %819 = vmatpush1.bf16.xpose.msra.mxu0 0
        %820 = vmatprep.subr.bf16.mxu0 0
        %821 = vmatpush1.bf16.xpose.msra.mxu0 0
        %822 = vmatprep.subr.bf16.mxu0 0
        %823 = vmatpush1.bf16.xpose.msra.mxu0 0
        %824 = vmatprep.subr.bf16.mxu0 0
        %825 = vmatpush1.bf16.xpose.msra.mxu0 0
        %826 = vmatprep.subr.bf16.mxu0 0
        %827 = vmatpush1.bf16.xpose.msra.mxu0 0
        %828 = vmatprep.subr.bf16.mxu0 0
        %829 = vmatpush1.bf16.xpose.msra.mxu0 0
        %830 = vmatprep.subr.bf16.mxu0 0
        %831 = vmatpush1.bf16.xpose.msra.mxu0 0
        %832 = vmatprep.subr.bf16.mxu0 0
        %833 = vmatpush1.bf16.xpose.msra.mxu0 0
        %834 = vmatprep.subr.bf16.mxu0 0
        %835 = vmatpush1.bf16.xpose.msra.mxu0 0
        %836 = vmatprep.subr.bf16.mxu0 0
        %837 = vmatpush1.bf16.xpose.msra.mxu0 0
        %838 = vmatprep.subr.bf16.mxu0 0
        %839 = vmatpush1.bf16.xpose.msra.mxu0 0
        %840 = vmatprep.subr.bf16.mxu0 0
        %841 = vmatpush1.bf16.xpose.msra.mxu0 0
        %842 = vmatprep.subr.bf16.mxu0 0
        %843 = vmatpush1.bf16.xpose.msra.mxu0 0
        %844 = vmatprep.subr.bf16.mxu0 0
        %845 = vmatpush1.bf16.xpose.msra.mxu0 0
        %846 = vmatprep.subr.bf16.mxu0 0
        %847 = vmatpush1.bf16.xpose.msra.mxu0 0
        %848 = vmatprep.mubr.bf16.mxu0 0
        %849 = vmatmul.mubr.bf16.gmra.mrb[0].mxu0 %v811
        %v850 = vpop.f32.mrb[0].mxu0
        %v851 = vadd.f32 0.0, %v850
        %v852 = vpop.f32.mrb[0].mxu0
        %v853 = vpop.f32.mrb[0].mxu0
        %v854 = vpop.f32.mrb[0].mxu0
        %855 = vdwg.mxu0
        %v856 = vsel %vm463, %v851, -inf
        %857 = vmax.xlane.f32.xlu0 %v856
        %v858 = vpop.xlane.xlu0 %857
        %v859 = vsub.f32 %v851, %v858
        %v860 = vmul.f32 %v859, 1.442695
        %v861 = vpow.pop %v860
        %v862 = vsel %vm463, %v861, 0.0
        %863 = vadd.xlane.f32.xlu0 %v862
        %v864 = vpop.xlane.xlu0 %863
        %v865 = vpack.c.bf16 %v861, %v861
        %866 = vrot.lane.b32.xlu0 %v462, 72
        %v867 = vpop.permute.xlu0 %866
        %v869 = vsel %vm463, %v865, 0
        %v872 = vsel %vm526, %v867, 0
        %874 = vmatprep.subr.bf16.mxu0 0
        %875 = vmatpush1.bf16.msra.mxu0 %v872
        %876 = vmatprep.subr.bf16.mxu0 0
        %877 = vmatpush1.bf16.msra.mxu0 0
        %878 = vmatprep.subr.bf16.mxu0 0
        %879 = vmatpush1.bf16.msra.mxu0 0
        %880 = vmatprep.subr.bf16.mxu0 0
        %881 = vmatpush1.bf16.msra.mxu0 0
        %882 = vmatprep.subr.bf16.mxu0 0
        %883 = vmatpush1.bf16.msra.mxu0 0
        %884 = vmatprep.subr.bf16.mxu0 0
        %885 = vmatpush1.bf16.msra.mxu0 0
        %886 = vmatprep.subr.bf16.mxu0 0
        %887 = vmatpush1.bf16.msra.mxu0 0
        %888 = vmatprep.subr.bf16.mxu0 0
        %889 = vmatpush1.bf16.msra.mxu0 0
        %890 = vmatprep.subr.bf16.mxu0 0
        %891 = vmatpush1.bf16.msra.mxu0 0
        %892 = vmatprep.subr.bf16.mxu0 0
        %893 = vmatpush1.bf16.msra.mxu0 0
        %894 = vmatprep.subr.bf16.mxu0 0
        %895 = vmatpush1.bf16.msra.mxu0 0
        %896 = vmatprep.subr.bf16.mxu0 0
        %897 = vmatpush1.bf16.msra.mxu0 0
        %898 = vmatprep.subr.bf16.mxu0 0
        %899 = vmatpush1.bf16.msra.mxu0 0
        %900 = vmatprep.subr.bf16.mxu0 0
        %901 = vmatpush1.bf16.msra.mxu0 0
        %902 = vmatprep.subr.bf16.mxu0 0
        %903 = vmatpush1.bf16.msra.mxu0 0
        %904 = vmatprep.subr.bf16.mxu0 0
        %905 = vmatpush1.bf16.msra.mxu0 0
        %906 = vmatprep.mubr.bf16.mxu0 0
        %907 = vmatmul.mubr.bf16.gmra.mrb[0].mxu0 %v869
        %v908 = vpop.f32.mrb[0].mxu0
        %v909 = vadd.f32 0.0, %v908
        %v910 = vpop.f32.mrb[0].mxu0
        %v911 = vpop.f32.mrb[0].mxu0
        %v912 = vpop.f32.mrb[0].mxu0
        %913 = vdwg.mxu0
        %v914 = vrcp.pop %v864
        %v915 = vmul.f32 %v909, %v914
        %917 = vrot.lane.b32.xlu0 %v915, 24
        %v918 = vpop.permute.xlu0 %917
        %vm920 = vcmask 261312
        %921 = vst.msk [vmem:[#allocation2] sm:$0xff] %vm920, %v918
        %v922 = vld [vmem:[#allocation2] sm:$0xff]
        %v923 = vpack.c.bf16 %v922, %v922
        %v924 = vld [vmem:[#allocation11] sm:$0xf]
        %v925 = vld [vmem:[#allocation11 + $0x4] sm:$0xf]
        %v926 = vld [vmem:[#allocation11 + $0x8] sm:$0xf]
        %v927 = vld [vmem:[#allocation11 + $0xc] sm:$0xf]
        %v932 = vunpack.c.l.b16 %v924
        %v933 = vunpack.c.l.b16 %v925
        %v934 = vunpack.c.l.b16 %v926
        %v935 = vunpack.c.l.b16 %v927
        %v936 = vpack.c.b16 %v933, %v932
        %v937 = vpack.c.b16 %v935, %v934
        %v941 = vsel %vm358, %v923, 0
        %943 = vmatprep.subr.bf16.mxu0 0
        %944 = vmatpush1.bf16.msra.mxu0 %v936
        %945 = vmatprep.subr.bf16.mxu0 0
        %946 = vmatpush1.bf16.msra.mxu0 %v937
        %947 = vmatprep.subr.bf16.mxu0 0
        %948 = vmatpush1.bf16.msra.mxu0 0
        %949 = vmatprep.subr.bf16.mxu0 0
        %950 = vmatpush1.bf16.msra.mxu0 0
        %951 = vmatprep.subr.bf16.mxu0 0
        %952 = vmatpush1.bf16.msra.mxu0 0
        %953 = vmatprep.subr.bf16.mxu0 0
        %954 = vmatpush1.bf16.msra.mxu0 0
        %955 = vmatprep.subr.bf16.mxu0 0
        %956 = vmatpush1.bf16.msra.mxu0 0
        %957 = vmatprep.subr.bf16.mxu0 0
        %958 = vmatpush1.bf16.msra.mxu0 0
        %959 = vmatprep.subr.bf16.mxu0 0
        %960 = vmatpush1.bf16.msra.mxu0 0
        %961 = vmatprep.subr.bf16.mxu0 0
        %962 = vmatpush1.bf16.msra.mxu0 0
        %963 = vmatprep.subr.bf16.mxu0 0
        %964 = vmatpush1.bf16.msra.mxu0 0
        %965 = vmatprep.subr.bf16.mxu0 0
        %966 = vmatpush1.bf16.msra.mxu0 0
        %967 = vmatprep.subr.bf16.mxu0 0
        %968 = vmatpush1.bf16.msra.mxu0 0
        %969 = vmatprep.subr.bf16.mxu0 0
        %970 = vmatpush1.bf16.msra.mxu0 0
        %971 = vmatprep.subr.bf16.mxu0 0
        %972 = vmatpush1.bf16.msra.mxu0 0
        %973 = vmatprep.subr.bf16.mxu0 0
        %974 = vmatpush1.bf16.msra.mxu0 0
        %975 = vmatprep.mubr.bf16.mxu0 0
        %976 = vmatmul.mubr.bf16.gmra.mrb[0].mxu0 %v941
        %v977 = vpop.f32.mrb[0].mxu0
        %v978 = vadd.f32 0.0, %v977
        %v979 = vpop.f32.mrb[0].mxu0
        %v980 = vpop.f32.mrb[0].mxu0
        %v981 = vpop.f32.mrb[0].mxu0
        %982 = vdwg.mxu0
        %983 = vst.msk [vmem:[%s336] sm:$0xff] %vm358, %v978
        %s984 = sand.u32 %s165, 1
        %s985 = scalar_lea.sflag [#allocation5], %s984
        %s986 = sand.u32 %s165, 1
        %s987 = smul.addr %s986, 8
        %s988 = scalar_lea.vmem [#allocation12], %s987
        // Predicated region
        $region61: #{tpu_custom_call.1} parent=39 // pred_check
          %p989 = pneg %p175
        $region62: #{tpu_custom_call.1} parent=39 // pred_check_branch
          %991 = sbr.rel (%p989) target = $region64
        $region63: #{tpu_custom_call.1} parent=39 // pred_region
          %s993 = ssub.s32 128, 128
          %994 = vsyncadd %s985, %s993
          %s995 = sadd.s32 %s31, %s30
          %s996 = smul.addr %s995, 128
          %s997 = scalar_lea.hbm %s5, %s996
          %s999 = sshll.u32 %s988, 4
          %s1000 = int_to_ptr.vmem [resolvable:$true] %s999
          %1002 = dma.vmem_to_hbm [thread:$0]  %s1000, 128, %s997, %s985
        $region64: #{tpu_custom_call.1} parent=39 // pred_fallthru
          _
      $region40: #{tpu_custom_call.1} parent=5 // pred_fallthru
        _
      %p1003 = scmp.le.s32.totalorder 2, %s21
      // Predicated region
      $region65: #{tpu_custom_call.1} parent=5 // pred_check
        %p1004 = pneg %p1003
      $region66: #{tpu_custom_call.1} parent=5 // pred_check_branch
        %1006 = sbr.rel (%p1004) target = $region68
      $region67: #{tpu_custom_call.1} parent=5 // pred_region
        %s1007 = ssub.s32 %s21, 2
        // Predicated region
        $region69: #{tpu_custom_call.1} parent=67 // pred_check
          %p1008 = pneg %p181
        $region70: #{tpu_custom_call.1} parent=67 // pred_check_branch
          %1010 = sbr.rel (%p1008) target = $region72
        $region71: #{tpu_custom_call.1} parent=67 // pred_region
          %s1011 = sand.u32 %s166, 1
          %s1012 = scalar_lea.sflag [#allocation5], %s1011
          %s1013 = sand.u32 %s166, 1
          %s1014 = smul.addr %s1013, 8
          %s1015 = scalar_lea.vmem [#allocation12], %s1014
          %1016 = dma.done %s1012, 128
        $region72: #{tpu_custom_call.1} parent=67 // pred_fallthru
          _
      $region68: #{tpu_custom_call.1} parent=5 // pred_fallthru
        _
    $region6: #{tpu_custom_call.1} parent=1 // loop_footer
      %s25 = sadd.s32 1, %s21
    $region7: #{tpu_custom_call.1} parent=1 // loop_footer_branch
      %20 = sbr.rel target = $region3
    $region8: #{tpu_custom_call.1} parent=1 // loop_exit
      _
    %1017 = vsyncpa [#allocation4], 1
    %s1018 = scalar_lea.sflag [#allocation4], 1
    %1019 = vsyncpa %s1018, 1
    %1020 = vsyncpa [#allocation7], 1
    %s1021 = scalar_lea.sflag [#allocation7], 1
    %1022 = vsyncpa %s1021, 1
    %1023 = vsyncpa [#allocation10], 1
    %1024 = vsyncpa [#allocation5], 1
    %s1025 = scalar_lea.sflag [#allocation5], 1
    %1026 = vsyncpa %s1025, 1

</llo_original>
